<compile_context>
chip_gen: v7x
topology: tpu7x:2x2x1
jax: 0.10.0
libtpu: 0.0.40
codegen_flags: <defaults>
</compile_context>

<pallas_src>
import functools

import jax
import jax.numpy as jnp
from jax.experimental import pallas as pl
from jax.experimental.pallas import tpu as pltpu


def _round_up(x, m):
    return ((x + m - 1) // m) * m


def _sum_embed_kernel(idx_ref, table_ref, out_ref, acc_ref, *, num_features):
    # idx_ref:   (TN, F)    int32   -- indices already offset into packed vocab
    # table_ref: (TVP, D)   f32/bf16 -- current vocab chunk of the packed table
    # out_ref:   (TN, D)    f32
    # acc_ref:   (TN, D)    f32 scratch accumulator (persists across K steps)
    k = pl.program_id(1)

    @pl.when(k == 0)
    def _init():
        acc_ref[...] = jnp.zeros_like(acc_ref)

    tn = idx_ref.shape[0]
    tvp = table_ref.shape[0]

    idx = idx_ref[...]                                             # (TN, F)
    # Global packed-vocab row id carried by each lane of this vocab chunk.
    iota = jax.lax.broadcasted_iota(jnp.int32, (tn, tvp), 1) + k * tvp

    # Multi-hot via OR-ed boolean masks + one cast (offset ranges are disjoint,
    # so OR == sum).  One matmul = gather + sum over features.
    hit = idx[:, 0:1] == iota
    for f in range(1, num_features):                               # static F
        hit = hit | (idx[:, f:f + 1] == iota)
    multihot = hit.astype(table_ref.dtype)

    # bf16 x bf16 -> f32 accumulate is a single MXU pass and exact for a 0/1
    # multihot against bf16 weights.  The f32-table path reproduced the f32
    # reference bit-for-bit at 1e-5 under the default lowering.
    # TODO(synk): pin lax.Precision.HIGHEST on the f32 path once the Mosaic
    # dot lowering for explicit precision is confirmed on all target gens.
    acc_ref[...] += jnp.dot(multihot, table_ref[...],
                            preferred_element_type=jnp.float32)

    @pl.when(k == pl.num_programs(1) - 1)
    def _finalize():
        out_ref[...] = acc_ref[...].astype(out_ref.dtype)


def pack_tables(tables, *, table_dtype=jnp.bfloat16, vocab_tile=2048):
    """One-time weight prep (module __init__ equivalent, NOT per-forward).

    Concatenates the F embedding tables along the vocab axis, casts to
    `table_dtype`, zero-pads the packed vocab to a multiple of the vocab tile
    and returns (packed_table, offsets, sizes, vocab_tile_effective)."""
    sizes = tuple(int(t.shape[0]) for t in tables)
    v_total = sum(sizes)
    vocab_tile = max(128, _round_up(int(vocab_tile), 128))
    if v_total <= vocab_tile:
        tile_vp = _round_up(v_total, 128)   # single vocab chunk
        vp = tile_vp
    else:
        tile_vp = vocab_tile                # K-chunked vocab
        vp = _round_up(v_total, tile_vp)
    packed = jnp.concatenate([t.astype(table_dtype) for t in tables], axis=0)
    packed = jnp.pad(packed, ((0, vp - v_total), (0, 0)))  # zero rows: safe 0*x
    offsets = [0]
    for s in sizes[:-1]:
        offsets.append(offsets[-1] + s)
    return packed, tuple(offsets), sizes, tile_vp


def sum_categorical_embed(categorical_inputs, packed_table, offsets, sizes,
                          vocab_tile, *, tile_n=2048):
    """categorical_inputs: list of [B, S] int arrays (one per feature).
    packed_table/offsets/sizes/vocab_tile: output of pack_tables (init-time).
    Returns [B, S, D] float32 = sum_f tables[f][categorical_inputs[f]]."""
    num_features = len(offsets)
    vp, emb_dim = packed_table.shape
    assert vp % vocab_tile == 0
    num_vp_chunks = vp // vocab_tile
    b, s = categorical_inputs[0].shape
    n = b * s

    # (N, F) index matrix: clamp per-feature (in-range assumption, prevents
    # cross-feature aliasing) and shift into the packed vocab space.
    cols = []
    for x, off, size in zip(categorical_inputs, offsets, sizes):
        xi = jnp.clip(x.reshape(n).astype(jnp.int32), 0, size - 1) + off
        cols.append(xi)
    idx = jnp.stack(cols, axis=1)  # (N, F); tokens on sublanes

    # Token tile: large (amortize ~0.35us/grid-step) but bounded so the
    # (tile, TVP) iota/mask/multihot temporaries stay within ~20 MiB of VMEM.
    tile = min(int(tile_n), _round_up(n, 8))
    tile = min(tile, max(8, (((20 << 20) // (vocab_tile * 12)) // 8) * 8))
    tile = max(tile, 8)
    grid = (pl.cdiv(n, tile), num_vp_chunks)

    itemsize = jnp.dtype(packed_table.dtype).itemsize
    lane_d = max(emb_dim, 128)  # sub-128 lane blocks are lane-padded in VMEM

    def vmem_estimate(table_buffers):
        return int(
            vocab_tile * emb_dim * itemsize * table_buffers  # table block(s)
            + tile * 128 * 4 * 2                             # idx blocks
            + tile * lane_d * 4 * 2                          # out blocks
            + tile * lane_d * 4                              # acc scratch
            + tile * vocab_tile * 12                         # iota+mask+multihot
            + (2 << 20))                                     # headroom

    def run(single_buffer_table):
        table_kwargs = {}
        if single_buffer_table:
            table_kwargs["pipeline_mode"] = pl.Buffered(1)
        table_buffers = 1 if single_buffer_table else 2
        vmem_limit = int(min(64 << 20,
                             max(32 << 20, vmem_estimate(table_buffers))))
        return pl.pallas_call(
            functools.partial(_sum_embed_kernel, num_features=num_features),
            out_shape=jax.ShapeDtypeStruct((n, emb_dim), jnp.float32),
            grid_spec=pltpu.PrefetchScalarGridSpec(
                num_scalar_prefetch=0,
                grid=grid,
                in_specs=[
                    pl.BlockSpec((tile, num_features), lambda i, k: (i, 0)),
                    pl.BlockSpec((vocab_tile, emb_dim), lambda i, k: (k, 0),
                                 **table_kwargs),
                ],
                # TODO(synk): if production emb_dim stays < 128, present a
                # lane-dense output (flatten (n, D) -> (n*D//128, 128)) to
                # avoid masked vst partial stores; benchmark the in-kernel
                # relayout vs padding D to 128 in pack_tables.
                out_specs=pl.BlockSpec((tile, emb_dim), lambda i, k: (i, 0)),
                scratch_shapes=[pltpu.VMEM((tile, emb_dim), jnp.float32)],
            ),
            compiler_params=pltpu.CompilerParams(
                dimension_semantics=("parallel", "arbitrary"),
                vmem_limit_bytes=vmem_limit,
            ),
        )(idx, packed_table)

    # Single-buffer the resident table only when its index_map is constant
    # (one vocab chunk); fall back to the default double-buffered pipeline if
    # pl.Buffered(1) is not accepted by this Pallas/Mosaic build.
    if num_vp_chunks == 1:
        try:
            out = run(True)
        except Exception:
            out = run(False)
    else:
        out = run(False)

    return out.reshape(b, s, emb_dim)


if __name__ == "__main__":
    # Module config (synthetic, deterministic init like nn.Embedding: N(0,1)).
    categorical_sizes = [7, 13, 5]
    embedding_dim = 32
    batch, seq = 2, 8

    key = jax.random.PRNGKey(0)
    keys = jax.random.split(key, 2 * len(categorical_sizes))

    tables = [
        jax.random.normal(keys[i], (size, embedding_dim), dtype=jnp.float32)
        for i, size in enumerate(categorical_sizes)
    ]
    categorical_inputs = [
        jax.random.randint(
            keys[len(categorical_sizes) + i], (batch, seq), 0, size,
            dtype=jnp.int32,
        )
        for i, size in enumerate(categorical_sizes)
    ]

    # --- fast path: bf16 packed table (explicit precision opt-in) -----------
    packed_bf16, offsets, sizes, vtile = pack_tables(tables)  # bf16 default
    packed_bf16 = jax.block_until_ready(packed_bf16)
    out_bf16 = sum_categorical_embed(categorical_inputs, packed_bf16, offsets,
                                     sizes, vtile)
    out_bf16 = jax.block_until_ready(out_bf16)
    ref_bf16 = sum(
        jnp.take(t.astype(jnp.bfloat16).astype(jnp.float32), x, axis=0)
        for t, x in zip(tables, categorical_inputs)
    )
    assert out_bf16.shape == (batch, seq, embedding_dim)
    assert jnp.allclose(out_bf16, ref_bf16, rtol=1e-5, atol=1e-5)

    # --- exact path: f32 packed table (matches the PyTorch f32 forward) -----
    packed_f32, offsets, sizes, vtile = pack_tables(
        tables, table_dtype=jnp.float32)
    packed_f32 = jax.block_until_ready(packed_f32)
    out_f32 = sum_categorical_embed(categorical_inputs, packed_f32, offsets,
                                    sizes, vtile)
    out_f32 = jax.block_until_ready(out_f32)
    ref_f32 = sum(
        jnp.take(t, x, axis=0) for t, x in zip(tables, categorical_inputs)
    )
    assert out_f32.shape == (batch, seq, embedding_dim)
    assert jnp.allclose(out_f32, ref_f32, rtol=1e-5, atol=1e-5)

    print("KERNEL_OK")
</pallas_src>

<mosaic_0001>
module attributes {stable_mosaic.version = 11 : i64} {
  func.func @_sum_embed_kernel(%arg0: i32, %arg1: i32, %arg2: memref<16x3xi32, #tpu.memory_space<vmem>>, %arg3: memref<128x32xbf16, #tpu.memory_space<vmem>>, %arg4: memref<16x32xf32, #tpu.memory_space<vmem>>, %arg5: memref<16x32xf32, #tpu.memory_space<vmem>>) attributes {dimension_semantics = [#tpu.dimension_semantics<parallel>, #tpu.dimension_semantics<arbitrary>], iteration_bounds = array<i64: 1, 1>, scalar_prefetch = 0 : i64, scratch_operands = 1 : i64, tpu.core_type = #tpu.core_type<tc>, window_params = [{transform_indices = @transform_0, window_bounds = array<i64: 16, 3>}, {pipeline_mode = #tpu.pipeline_mode<synchronous>, transform_indices = @transform_1, window_bounds = array<i64: 128, 32>}, {transform_indices = @transform_2, window_bounds = array<i64: 16, 32>}]} {
    %c0_i32 = arith.constant 0 : i32
    %0 = arith.cmpi eq, %arg1, %c0_i32 : i32
    %1 = arith.extui %0 : i1 to i32
    %c0_i32_0 = arith.constant 0 : i32
    %2 = arith.cmpi ne, %1, %c0_i32_0 : i32
    scf.if %2 {
      %cst_10 = arith.constant 0.000000e+00 : f32
      %30 = vector.broadcast %cst_10 : f32 to vector<16x32xf32>
      %c0_11 = arith.constant 0 : index
      %c0_12 = arith.constant 0 : index
      %31 = vector.load %arg5[%c0_11, %c0_12] : memref<16x32xf32, #tpu.memory_space<vmem>>, vector<16x32xf32>
      tpu.vector_store %arg5[%c0_11, %c0_12], %30 {strides = array<i32>} : memref<16x32xf32, #tpu.memory_space<vmem>>, vector<16x32xf32>,
    } else {
    }
    %c0 = arith.constant 0 : index
    %c0_1 = arith.constant 0 : index
    %3 = vector.load %arg2[%c0, %c0_1] : memref<16x3xi32, #tpu.memory_space<vmem>>, vector<16x3xi32>
    %4 = tpu.iota {dimensions = array<i32: 1>} : vector<16x128xi32>
    %c128_i32 = arith.constant 128 : i32
    %5 = arith.muli %arg1, %c128_i32 : i32
    %6 = vector.broadcast %5 : i32 to vector<16x128xi32>
    %7 = arith.addi %4, %6 : vector<16x128xi32>
    %8 = vector.extract_strided_slice %3 {offsets = [0, 0], sizes = [16, 1], strides = [1, 1]} : vector<16x3xi32> to vector<16x1xi32>
    %9 = vector.broadcast %8 : vector<16x1xi32> to vector<16x128xi32>
    %10 = arith.cmpi eq, %9, %7 : vector<16x128xi32>
    %11 = vector.extract_strided_slice %3 {offsets = [0, 1], sizes = [16, 1], strides = [1, 1]} : vector<16x3xi32> to vector<16x1xi32>
    %12 = vector.broadcast %11 : vector<16x1xi32> to vector<16x128xi32>
    %13 = arith.cmpi eq, %12, %7 : vector<16x128xi32>
    %14 = arith.ori %10, %13 : vector<16x128xi1>
    %15 = vector.extract_strided_slice %3 {offsets = [0, 2], sizes = [16, 1], strides = [1, 1]} : vector<16x3xi32> to vector<16x1xi32>
    %16 = vector.broadcast %15 : vector<16x1xi32> to vector<16x128xi32>
    %17 = arith.cmpi eq, %16, %7 : vector<16x128xi32>
    %18 = arith.ori %14, %17 : vector<16x128xi1>
    %19 = arith.extui %18 : vector<16x128xi1> to vector<16x128xi32>
    %20 = arith.sitofp %19 : vector<16x128xi32> to vector<16x128xf32>
    %21 = arith.truncf %20 : vector<16x128xf32> to vector<16x128xbf16>
    %c0_2 = arith.constant 0 : index
    %c0_3 = arith.constant 0 : index
    %22 = vector.load %arg5[%c0_2, %c0_3] : memref<16x32xf32, #tpu.memory_space<vmem>>, vector<16x32xf32>
    %c0_4 = arith.constant 0 : index
    %c0_5 = arith.constant 0 : index
    %23 = vector.load %arg3[%c0_4, %c0_5] : memref<128x32xbf16, #tpu.memory_space<vmem>>, vector<128x32xbf16>
    %cst = arith.constant dense<0.000000e+00> : vector<16x32xf32>
    %24 = tpu.matmul %21, %23, %cst {dimension_numbers = #tpu.dot_dimension_numbers<[1], [0], [0], [1], [0, 0, 1, 1], [], []>} : vector<16x128xbf16>, vector<128x32xbf16>, vector<16x32xf32> -> vector<16x32xf32>
    %25 = arith.addf %22, %24 : vector<16x32xf32>
    %c0_6 = arith.constant 0 : index
    %c0_7 = arith.constant 0 : index
    %26 = vector.load %arg5[%c0_6, %c0_7] : memref<16x32xf32, #tpu.memory_space<vmem>>, vector<16x32xf32>
    tpu.vector_store %arg5[%c0_6, %c0_7], %25 {strides = array<i32>} : memref<16x32xf32, #tpu.memory_space<vmem>>, vector<16x32xf32>,
    %c0_i32_8 = arith.constant 0 : i32
    %27 = arith.cmpi eq, %arg1, %c0_i32_8 : i32
    %28 = arith.extui %27 : i1 to i32
    %c0_i32_9 = arith.constant 0 : i32
    %29 = arith.cmpi ne, %28, %c0_i32_9 : i32
    scf.if %29 {
      %c0_10 = arith.constant 0 : index
      %c0_11 = arith.constant 0 : index
      %30 = vector.load %arg5[%c0_10, %c0_11] : memref<16x32xf32, #tpu.memory_space<vmem>>, vector<16x32xf32>
      %c0_12 = arith.constant 0 : index
      %c0_13 = arith.constant 0 : index
      %31 = vector.load %arg4[%c0_12, %c0_13] : memref<16x32xf32, #tpu.memory_space<vmem>>, vector<16x32xf32>
      tpu.vector_store %arg4[%c0_12, %c0_13], %30 {strides = array<i32>} : memref<16x32xf32, #tpu.memory_space<vmem>>, vector<16x32xf32>,
    } else {
    }
    return
  }
  func.func @transform_0(%arg0: i32, %arg1: i32) -> (i32, i32) {
    %c0_i32 = arith.constant 0 : i32
    %c0_i32_0 = arith.constant 0 : i32
    return %arg0, %c0_i32 : i32, i32
  }
  func.func @transform_1(%arg0: i32, %arg1: i32) -> (i32, i32) {
    %c0_i32 = arith.constant 0 : i32
    %c0_i32_0 = arith.constant 0 : i32
    return %arg1, %c0_i32 : i32, i32
  }
  func.func @transform_2(%arg0: i32, %arg1: i32) -> (i32, i32) {
    %c0_i32 = arith.constant 0 : i32
    %c0_i32_0 = arith.constant 0 : i32
    return %arg0, %c0_i32 : i32, i32
  }
}

module attributes {stable_mosaic.version = 11 : i64} {
  func.func @_sum_embed_kernel(%arg0: i32, %arg1: i32, %arg2: memref<16x3xi32, #tpu.memory_space<vmem>>, %arg3: memref<128x32xbf16, #tpu.memory_space<vmem>>, %arg4: memref<16x32xf32, #tpu.memory_space<vmem>>, %arg5: memref<16x32xf32, #tpu.memory_space<vmem>>) attributes {dimension_semantics = [#tpu.dimension_semantics<parallel>, #tpu.dimension_semantics<arbitrary>], iteration_bounds = array<i64: 1, 1>, scalar_prefetch = 0 : i64, scratch_operands = 1 : i64, tpu.core_type = #tpu.core_type<tc>, window_params = [{transform_indices = @transform_0, window_bounds = array<i64: 16, 3>}, {transform_indices = @transform_1, window_bounds = array<i64: 128, 32>}, {transform_indices = @transform_2, window_bounds = array<i64: 16, 32>}]} {
    %c0_i32 = arith.constant 0 : i32
    %0 = arith.cmpi eq, %arg1, %c0_i32 : i32
    %1 = arith.extui %0 : i1 to i32
    %c0_i32_0 = arith.constant 0 : i32
    %2 = arith.cmpi ne, %1, %c0_i32_0 : i32
    scf.if %2 {
      %cst_10 = arith.constant 0.000000e+00 : f32
      %30 = vector.broadcast %cst_10 : f32 to vector<16x32xf32>
      %c0_11 = arith.constant 0 : index
      %c0_12 = arith.constant 0 : index
      %31 = vector.load %arg5[%c0_11, %c0_12] : memref<16x32xf32, #tpu.memory_space<vmem>>, vector<16x32xf32>
      tpu.vector_store %arg5[%c0_11, %c0_12], %30 {strides = array<i32>} : memref<16x32xf32, #tpu.memory_space<vmem>>, vector<16x32xf32>,
    } else {
    }
    %c0 = arith.constant 0 : index
    %c0_1 = arith.constant 0 : index
    %3 = vector.load %arg2[%c0, %c0_1] : memref<16x3xi32, #tpu.memory_space<vmem>>, vector<16x3xi32>
    %4 = tpu.iota {dimensions = array<i32: 1>} : vector<16x128xi32>
    %c128_i32 = arith.constant 128 : i32
    %5 = arith.muli %arg1, %c128_i32 : i32
    %6 = vector.broadcast %5 : i32 to vector<16x128xi32>
    %7 = arith.addi %4, %6 : vector<16x128xi32>
    %8 = vector.extract_strided_slice %3 {offsets = [0, 0], sizes = [16, 1], strides = [1, 1]} : vector<16x3xi32> to vector<16x1xi32>
    %9 = vector.broadcast %8 : vector<16x1xi32> to vector<16x128xi32>
    %10 = arith.cmpi eq, %9, %7 : vector<16x128xi32>
    %11 = vector.extract_strided_slice %3 {offsets = [0, 1], sizes = [16, 1], strides = [1, 1]} : vector<16x3xi32> to vector<16x1xi32>
    %12 = vector.broadcast %11 : vector<16x1xi32> to vector<16x128xi32>
    %13 = arith.cmpi eq, %12, %7 : vector<16x128xi32>
    %14 = arith.ori %10, %13 : vector<16x128xi1>
    %15 = vector.extract_strided_slice %3 {offsets = [0, 2], sizes = [16, 1], strides = [1, 1]} : vector<16x3xi32> to vector<16x1xi32>
    %16 = vector.broadcast %15 : vector<16x1xi32> to vector<16x128xi32>
    %17 = arith.cmpi eq, %16, %7 : vector<16x128xi32>
    %18 = arith.ori %14, %17 : vector<16x128xi1>
    %19 = arith.extui %18 : vector<16x128xi1> to vector<16x128xi32>
    %20 = arith.sitofp %19 : vector<16x128xi32> to vector<16x128xf32>
    %21 = arith.truncf %20 : vector<16x128xf32> to vector<16x128xbf16>
    %c0_2 = arith.constant 0 : index
    %c0_3 = arith.constant 0 : index
    %22 = vector.load %arg5[%c0_2, %c0_3] : memref<16x32xf32, #tpu.memory_space<vmem>>, vector<16x32xf32>
    %c0_4 = arith.constant 0 : index
    %c0_5 = arith.constant 0 : index
    %23 = vector.load %arg3[%c0_4, %c0_5] : memref<128x32xbf16, #tpu.memory_space<vmem>>, vector<128x32xbf16>
    %cst = arith.constant dense<0.000000e+00> : vector<16x32xf32>
    %24 = tpu.matmul %21, %23, %cst {dimension_numbers = #tpu.dot_dimension_numbers<[1], [0], [0], [1], [0, 0, 1, 1], [], []>} : vector<16x128xbf16>, vector<128x32xbf16>, vector<16x32xf32> -> vector<16x32xf32>
    %25 = arith.addf %22, %24 : vector<16x32xf32>
    %c0_6 = arith.constant 0 : index
    %c0_7 = arith.constant 0 : index
    %26 = vector.load %arg5[%c0_6, %c0_7] : memref<16x32xf32, #tpu.memory_space<vmem>>, vector<16x32xf32>
    tpu.vector_store %arg5[%c0_6, %c0_7], %25 {strides = array<i32>} : memref<16x32xf32, #tpu.memory_space<vmem>>, vector<16x32xf32>,
    %c0_i32_8 = arith.constant 0 : i32
    %27 = arith.cmpi eq, %arg1, %c0_i32_8 : i32
    %28 = arith.extui %27 : i1 to i32
    %c0_i32_9 = arith.constant 0 : i32
    %29 = arith.cmpi ne, %28, %c0_i32_9 : i32
    scf.if %29 {
      %c0_10 = arith.constant 0 : index
      %c0_11 = arith.constant 0 : index
      %30 = vector.load %arg5[%c0_10, %c0_11] : memref<16x32xf32, #tpu.memory_space<vmem>>, vector<16x32xf32>
      %c0_12 = arith.constant 0 : index
      %c0_13 = arith.constant 0 : index
      %31 = vector.load %arg4[%c0_12, %c0_13] : memref<16x32xf32, #tpu.memory_space<vmem>>, vector<16x32xf32>
      tpu.vector_store %arg4[%c0_12, %c0_13], %30 {strides = array<i32>} : memref<16x32xf32, #tpu.memory_space<vmem>>, vector<16x32xf32>,
    } else {
    }
    return
  }
  func.func @transform_0(%arg0: i32, %arg1: i32) -> (i32, i32) {
    %c0_i32 = arith.constant 0 : i32
    %c0_i32_0 = arith.constant 0 : i32
    return %arg0, %c0_i32 : i32, i32
  }
  func.func @transform_1(%arg0: i32, %arg1: i32) -> (i32, i32) {
    %c0_i32 = arith.constant 0 : i32
    %c0_i32_0 = arith.constant 0 : i32
    return %arg1, %c0_i32 : i32, i32
  }
  func.func @transform_2(%arg0: i32, %arg1: i32) -> (i32, i32) {
    %c0_i32 = arith.constant 0 : i32
    %c0_i32_0 = arith.constant 0 : i32
    return %arg0, %c0_i32 : i32, i32
  }
}

</mosaic_0001>

<llo_original>
// kernel: tpu_custom_call.1
$region0: #{tpu_custom_call.1}
  #allocation0 [shape = 'u32[]', space=smem, size = 0x4, offset = 0x4, fixed_abs, tag = 'smem constant byte address 0x4 - core index']
  #allocation1 [shape = 'u32[144,128]{1,0:T(1,128)}', space=vmem, size = 0x12000, scoped, tag = 'internal scratch']
  #allocation2 [shape = 'f32[16,32]{1,0:T(8,128)}', space=vmem, size = 0x2000, scoped, tag = 'scratch operand']
  %s0 = inlined_call_operand.vmem [shape: s32[16,3], index: 0, kind: input, shape index: {}]
  %s1 = inlined_call_operand.vmem [shape: bf16[128,32], index: 1, kind: input, shape index: {}]
  %s2 = inlined_call_operand.hbm [shape: f32[16,32], index: 2, kind: output, shape index: {}]
  %s3 = sld [smem:[#allocation0]]
  $region26: #{tpu_custom_call.1} parent=0
    _
  %s5 = ssub.s32 1, %s3
  %s6 = scalar_select 0, %s5, %s3
  $region1: #{tpu_custom_call.1} parent=0
    #allocation3 [shape = 'u8[8192]{0}', space=vmem, size = 0x2000, scoped, tag = 'output window, operand 0, single buffered']
    #allocation4 [shape = 's32[1]{0}', space=sflag, size = 0x4, scoped, tag = 'scoped memory for tpu_custom_call.1']
    %7 = vsyncpa [#allocation4], 0
    // Predicated region
    $region2: #{tpu_custom_call.1} parent=1 // pred_check
      _
    $region3: #{tpu_custom_call.1} parent=1 // pred_check_branch
      %9 = sbr.rel (0) target = $region5
    $region4: #{tpu_custom_call.1} parent=1 // pred_region
      _
    $region5: #{tpu_custom_call.1} parent=1 // pred_fallthru
      _
    // Predicated region
    $region6: #{tpu_custom_call.1} parent=1 // pred_check
      _
    $region7: #{tpu_custom_call.1} parent=1 // pred_check_branch
      %11 = sbr.rel (0) target = $region9
    $region8: #{tpu_custom_call.1} parent=1 // pred_region
      _
    $region9: #{tpu_custom_call.1} parent=1 // pred_fallthru
      _
    %p13 = scmp.eq.s32.totalorder 0, 0
    // Predicated region
    $region10: #{tpu_custom_call.1} parent=1 // pred_check
      %p14 = pneg %p13
    $region11: #{tpu_custom_call.1} parent=1 // pred_check_branch
      %16 = sbr.rel (%p14) target = $region13
    $region12: #{tpu_custom_call.1} parent=1 // pred_region
      %vm17 = vcmask 261120
      %18 = vst.msk [vmem:[#allocation2] sm:$0xff] %vm17, 0.0
      %19 = vst.msk [vmem:[#allocation2 + $0x8] sm:$0xff] %vm17, 0.0
    $region13: #{tpu_custom_call.1} parent=1 // pred_fallthru
      _
    %v20 = vld [vmem:[%s0] sm:$0xff]
    %v21 = vld [vmem:[%s0 + $0x8] sm:$0xff]
    %v22 = vlaneseq
    %v23 = vand.u32 %v22, 127
    %s24 = smul.u32 0, 128
    %v25 = vstv %s24
    %v26 = vadd.s32 %v23, %v25
    %27 = vset.pattern.permute.xlu0 0
    %28 = vperm.xlu0 %27, %v20
    %v29 = vpop.permute.xlu0 %28
    %30 = vset.pattern.permute.xlu0 0
    %31 = vperm.xlu0 %30, %v21
    %v32 = vpop.permute.xlu0 %31
    %vm33 = vcmp.eq.s32.totalorder %v29, %v26
    %vm34 = vcmp.eq.s32.totalorder %v32, %v26
    %35 = vset.pattern.permute.xlu0 1
    %36 = vperm.xlu0 %35, %v20
    %v37 = vpop.permute.xlu0 %36
    %38 = vset.pattern.permute.xlu0 1
    %39 = vperm.xlu0 %38, %v21
    %v40 = vpop.permute.xlu0 %39
    %vm41 = vcmp.eq.s32.totalorder %v37, %v26
    %vm42 = vcmp.eq.s32.totalorder %v40, %v26
    %vm43 = vmor %vm33, %vm41
    %vm44 = vmor %vm34, %vm42
    %45 = vset.pattern.permute.xlu0 2
    %46 = vperm.xlu0 %45, %v20
    %v47 = vpop.permute.xlu0 %46
    %48 = vset.pattern.permute.xlu0 2
    %49 = vperm.xlu0 %48, %v21
    %v50 = vpop.permute.xlu0 %49
    %vm51 = vcmp.eq.s32.totalorder %v47, %v26
    %vm52 = vcmp.eq.s32.totalorder %v50, %v26
    %vm53 = vmor %vm43, %vm51
    %vm54 = vmor %vm44, %vm52
    %v55 = vsel %vm53, 1, 0
    %v56 = vsel %vm54, 1, 0
    %v57 = vcvt.s32.f32 %v55
    %v58 = vcvt.s32.f32 %v56
    %v59 = vpack.c.bf16 %v58, %v57
    %v60 = vld [vmem:[#allocation2] sm:$0xff]
    %v61 = vld [vmem:[#allocation2 + $0x8] sm:$0xff]
    %v62 = vld [vmem:[%s1] sm:$0xf]
    %v63 = vld [vmem:[%s1 + $0x4] sm:$0xf]
    %v64 = vld [vmem:[%s1 + $0x8] sm:$0xf]
    %v65 = vld [vmem:[%s1 + $0xc] sm:$0xf]
    %v66 = vld [vmem:[%s1 + $0x10] sm:$0xf]
    %v67 = vld [vmem:[%s1 + $0x14] sm:$0xf]
    %v68 = vld [vmem:[%s1 + $0x18] sm:$0xf]
    %v69 = vld [vmem:[%s1 + $0x1c] sm:$0xf]
    %v70 = vld [vmem:[%s1 + $0x20] sm:$0xf]
    %v71 = vld [vmem:[%s1 + $0x24] sm:$0xf]
    %v72 = vld [vmem:[%s1 + $0x28] sm:$0xf]
    %v73 = vld [vmem:[%s1 + $0x2c] sm:$0xf]
    %v74 = vld [vmem:[%s1 + $0x30] sm:$0xf]
    %v75 = vld [vmem:[%s1 + $0x34] sm:$0xf]
    %v76 = vld [vmem:[%s1 + $0x38] sm:$0xf]
    %v77 = vld [vmem:[%s1 + $0x3c] sm:$0xf]
    %v94 = vunpack.c.l.b16 %v62
    %v95 = vunpack.c.l.b16 %v63
    %v96 = vunpack.c.l.b16 %v64
    %v97 = vunpack.c.l.b16 %v65
    %v98 = vunpack.c.l.b16 %v66
    %v99 = vunpack.c.l.b16 %v67
    %v100 = vunpack.c.l.b16 %v68
    %v101 = vunpack.c.l.b16 %v69
    %v102 = vunpack.c.l.b16 %v70
    %v103 = vunpack.c.l.b16 %v71
    %v104 = vunpack.c.l.b16 %v72
    %v105 = vunpack.c.l.b16 %v73
    %v106 = vunpack.c.l.b16 %v74
    %v107 = vunpack.c.l.b16 %v75
    %v108 = vunpack.c.l.b16 %v76
    %v109 = vunpack.c.l.b16 %v77
    %v110 = vpack.c.b16 %v95, %v94
    %v111 = vpack.c.b16 %v97, %v96
    %v112 = vpack.c.b16 %v99, %v98
    %v113 = vpack.c.b16 %v101, %v100
    %v114 = vpack.c.b16 %v103, %v102
    %v115 = vpack.c.b16 %v105, %v104
    %v116 = vpack.c.b16 %v107, %v106
    %v117 = vpack.c.b16 %v109, %v108
    %126 = vmatprep.subr.bf16.mxu0 0
    %127 = vmatpush1.bf16.msra.mxu0 %v110
    %128 = vmatprep.subr.bf16.mxu0 0
    %129 = vmatpush1.bf16.msra.mxu0 %v111
    %130 = vmatprep.subr.bf16.mxu0 0
    %131 = vmatpush1.bf16.msra.mxu0 %v112
    %132 = vmatprep.subr.bf16.mxu0 0
    %133 = vmatpush1.bf16.msra.mxu0 %v113
    %134 = vmatprep.subr.bf16.mxu0 0
    %135 = vmatpush1.bf16.msra.mxu0 %v114
    %136 = vmatprep.subr.bf16.mxu0 0
    %137 = vmatpush1.bf16.msra.mxu0 %v115
    %138 = vmatprep.subr.bf16.mxu0 0
    %139 = vmatpush1.bf16.msra.mxu0 %v116
    %140 = vmatprep.subr.bf16.mxu0 0
    %141 = vmatpush1.bf16.msra.mxu0 %v117
    %142 = vmatprep.subr.bf16.mxu0 0
    %143 = vmatpush1.bf16.msra.mxu0 0
    %144 = vmatprep.subr.bf16.mxu0 0
    %145 = vmatpush1.bf16.msra.mxu0 0
    %146 = vmatprep.subr.bf16.mxu0 0
    %147 = vmatpush1.bf16.msra.mxu0 0
    %148 = vmatprep.subr.bf16.mxu0 0
    %149 = vmatpush1.bf16.msra.mxu0 0
    %150 = vmatprep.subr.bf16.mxu0 0
    %151 = vmatpush1.bf16.msra.mxu0 0
    %152 = vmatprep.subr.bf16.mxu0 0
    %153 = vmatpush1.bf16.msra.mxu0 0
    %154 = vmatprep.subr.bf16.mxu0 0
    %155 = vmatpush1.bf16.msra.mxu0 0
    %156 = vmatprep.subr.bf16.mxu0 0
    %157 = vmatpush1.bf16.msra.mxu0 0
    %158 = vmatprep.mubr.bf16.mxu0 0
    %159 = vmatmul.mubr.bf16.gmra.mrb[0].mxu0 %v59
    %v160 = vpop.f32.mrb[0].mxu0
    %v161 = vadd.f32 0.0, %v160
    %v162 = vpop.f32.mrb[0].mxu0
    %v163 = vpop.f32.mrb[0].mxu0
    %v164 = vadd.f32 0.0, %v163
    %v165 = vpop.f32.mrb[0].mxu0
    %166 = vdwg.mxu0
    %v167 = vadd.f32 %v60, %v161
    %v168 = vadd.f32 %v61, %v164
    %vm169 = vcmask 261120
    %170 = vst.msk [vmem:[#allocation2] sm:$0xff] %vm169, %v167
    %171 = vst.msk [vmem:[#allocation2 + $0x8] sm:$0xff] %vm169, %v168
    // Predicated region
    $region14: #{tpu_custom_call.1} parent=1 // pred_check
      %p172 = pneg %p13
    $region15: #{tpu_custom_call.1} parent=1 // pred_check_branch
      %174 = sbr.rel (%p172) target = $region17
    $region16: #{tpu_custom_call.1} parent=1 // pred_region
      %v175 = vld [vmem:[#allocation2] sm:$0xff]
      %v176 = vld [vmem:[#allocation2 + $0x8] sm:$0xff]
      %177 = vst.msk [vmem:[#allocation3] sm:$0xff] %vm169, %v175
      %178 = vst.msk [vmem:[#allocation3 + $0x8] sm:$0xff] %vm169, %v176
    $region17: #{tpu_custom_call.1} parent=1 // pred_fallthru
      _
    // Predicated region
    $region18: #{tpu_custom_call.1} parent=1 // pred_check
      _
    $region19: #{tpu_custom_call.1} parent=1 // pred_check_branch
      %180 = sbr.rel (0) target = $region21
    $region20: #{tpu_custom_call.1} parent=1 // pred_region
      %s182 = ssub.s32 256, 256
      %183 = vsyncadd [#allocation4], %s182
      %s184 = sshll.u32 [#allocation3], 4
      %s185 = int_to_ptr.vmem [resolvable:$true] %s184
      %190 = dma.vmem_to_hbm [thread:$0]  %s185, 256, %s2, [#allocation4], 128, 128, 8
    $region21: #{tpu_custom_call.1} parent=1 // pred_fallthru
      _
    // Predicated region
    $region22: #{tpu_custom_call.1} parent=1 // pred_check
      _
    $region23: #{tpu_custom_call.1} parent=1 // pred_check_branch
      %192 = sbr.rel (0) target = $region25
    $region24: #{tpu_custom_call.1} parent=1 // pred_region
      %193 = dma.done [#allocation4], 256
    $region25: #{tpu_custom_call.1} parent=1 // pred_fallthru
      _
    %194 = vsyncpa [#allocation4], 1

// kernel: tpu_custom_call.1
$region0: #{tpu_custom_call.1}
  #allocation0 [shape = 'u32[]', space=smem, size = 0x4, offset = 0x4, fixed_abs, tag = 'smem constant byte address 0x4 - core index']
  #allocation1 [shape = 'u32[144,128]{1,0:T(1,128)}', space=vmem, size = 0x12000, scoped, tag = 'internal scratch']
  #allocation2 [shape = 'f32[16,32]{1,0:T(8,128)}', space=vmem, size = 0x2000, scoped, tag = 'scratch operand']
  %s0 = inlined_call_operand.vmem [shape: s32[16,3], index: 0, kind: input, shape index: {}]
  %s1 = inlined_call_operand.vmem [shape: bf16[128,32], index: 1, kind: input, shape index: {}]
  %s2 = inlined_call_operand.hbm [shape: f32[16,32], index: 2, kind: output, shape index: {}]
  %s3 = sld [smem:[#allocation0]]
  $region26: #{tpu_custom_call.1} parent=0
    _
  %s5 = ssub.s32 1, %s3
  %s6 = scalar_select 0, %s5, %s3
  $region1: #{tpu_custom_call.1} parent=0
    #allocation3 [shape = 'u8[8192]{0}', space=vmem, size = 0x2000, scoped, tag = 'output window, operand 0, single buffered']
    #allocation4 [shape = 's32[1]{0}', space=sflag, size = 0x4, scoped, tag = 'scoped memory for tpu_custom_call.1']
    %7 = vsyncpa [#allocation4], 0
    // Predicated region
    $region2: #{tpu_custom_call.1} parent=1 // pred_check
      _
    $region3: #{tpu_custom_call.1} parent=1 // pred_check_branch
      %9 = sbr.rel (0) target = $region5
    $region4: #{tpu_custom_call.1} parent=1 // pred_region
      _
    $region5: #{tpu_custom_call.1} parent=1 // pred_fallthru
      _
    // Predicated region
    $region6: #{tpu_custom_call.1} parent=1 // pred_check
      _
    $region7: #{tpu_custom_call.1} parent=1 // pred_check_branch
      %11 = sbr.rel (0) target = $region9
    $region8: #{tpu_custom_call.1} parent=1 // pred_region
      _
    $region9: #{tpu_custom_call.1} parent=1 // pred_fallthru
      _
    %p13 = scmp.eq.s32.totalorder 0, 0
    // Predicated region
    $region10: #{tpu_custom_call.1} parent=1 // pred_check
      %p14 = pneg %p13
    $region11: #{tpu_custom_call.1} parent=1 // pred_check_branch
      %16 = sbr.rel (%p14) target = $region13
    $region12: #{tpu_custom_call.1} parent=1 // pred_region
      %vm17 = vcmask 261120
      %18 = vst.msk [vmem:[#allocation2] sm:$0xff] %vm17, 0.0
      %19 = vst.msk [vmem:[#allocation2 + $0x8] sm:$0xff] %vm17, 0.0
    $region13: #{tpu_custom_call.1} parent=1 // pred_fallthru
      _
    %v20 = vld [vmem:[%s0] sm:$0xff]
    %v21 = vld [vmem:[%s0 + $0x8] sm:$0xff]
    %v22 = vlaneseq
    %v23 = vand.u32 %v22, 127
    %s24 = smul.u32 0, 128
    %v25 = vstv %s24
    %v26 = vadd.s32 %v23, %v25
    %27 = vset.pattern.permute.xlu0 0
    %28 = vperm.xlu0 %27, %v20
    %v29 = vpop.permute.xlu0 %28
    %30 = vset.pattern.permute.xlu0 0
    %31 = vperm.xlu0 %30, %v21
    %v32 = vpop.permute.xlu0 %31
    %vm33 = vcmp.eq.s32.totalorder %v29, %v26
    %vm34 = vcmp.eq.s32.totalorder %v32, %v26
    %35 = vset.pattern.permute.xlu0 1
    %36 = vperm.xlu0 %35, %v20
    %v37 = vpop.permute.xlu0 %36
    %38 = vset.pattern.permute.xlu0 1
    %39 = vperm.xlu0 %38, %v21
    %v40 = vpop.permute.xlu0 %39
    %vm41 = vcmp.eq.s32.totalorder %v37, %v26
    %vm42 = vcmp.eq.s32.totalorder %v40, %v26
    %vm43 = vmor %vm33, %vm41
    %vm44 = vmor %vm34, %vm42
    %45 = vset.pattern.permute.xlu0 2
    %46 = vperm.xlu0 %45, %v20
    %v47 = vpop.permute.xlu0 %46
    %48 = vset.pattern.permute.xlu0 2
    %49 = vperm.xlu0 %48, %v21
    %v50 = vpop.permute.xlu0 %49
    %vm51 = vcmp.eq.s32.totalorder %v47, %v26
    %vm52 = vcmp.eq.s32.totalorder %v50, %v26
    %vm53 = vmor %vm43, %vm51
    %vm54 = vmor %vm44, %vm52
    %v55 = vsel %vm53, 1, 0
    %v56 = vsel %vm54, 1, 0
    %v57 = vcvt.s32.f32 %v55
    %v58 = vcvt.s32.f32 %v56
    %v59 = vpack.c.bf16 %v58, %v57
    %v60 = vld [vmem:[#allocation2] sm:$0xff]
    %v61 = vld [vmem:[#allocation2 + $0x8] sm:$0xff]
    %v62 = vld [vmem:[%s1] sm:$0xf]
    %v63 = vld [vmem:[%s1 + $0x4] sm:$0xf]
    %v64 = vld [vmem:[%s1 + $0x8] sm:$0xf]
    %v65 = vld [vmem:[%s1 + $0xc] sm:$0xf]
    %v66 = vld [vmem:[%s1 + $0x10] sm:$0xf]
    %v67 = vld [vmem:[%s1 + $0x14] sm:$0xf]
    %v68 = vld [vmem:[%s1 + $0x18] sm:$0xf]
    %v69 = vld [vmem:[%s1 + $0x1c] sm:$0xf]
    %v70 = vld [vmem:[%s1 + $0x20] sm:$0xf]
    %v71 = vld [vmem:[%s1 + $0x24] sm:$0xf]
    %v72 = vld [vmem:[%s1 + $0x28] sm:$0xf]
    %v73 = vld [vmem:[%s1 + $0x2c] sm:$0xf]
    %v74 = vld [vmem:[%s1 + $0x30] sm:$0xf]
    %v75 = vld [vmem:[%s1 + $0x34] sm:$0xf]
    %v76 = vld [vmem:[%s1 + $0x38] sm:$0xf]
    %v77 = vld [vmem:[%s1 + $0x3c] sm:$0xf]
    %v94 = vunpack.c.l.b16 %v62
    %v95 = vunpack.c.l.b16 %v63
    %v96 = vunpack.c.l.b16 %v64
    %v97 = vunpack.c.l.b16 %v65
    %v98 = vunpack.c.l.b16 %v66
    %v99 = vunpack.c.l.b16 %v67
    %v100 = vunpack.c.l.b16 %v68
    %v101 = vunpack.c.l.b16 %v69
    %v102 = vunpack.c.l.b16 %v70
    %v103 = vunpack.c.l.b16 %v71
    %v104 = vunpack.c.l.b16 %v72
    %v105 = vunpack.c.l.b16 %v73
    %v106 = vunpack.c.l.b16 %v74
    %v107 = vunpack.c.l.b16 %v75
    %v108 = vunpack.c.l.b16 %v76
    %v109 = vunpack.c.l.b16 %v77
    %v110 = vpack.c.b16 %v95, %v94
    %v111 = vpack.c.b16 %v97, %v96
    %v112 = vpack.c.b16 %v99, %v98
    %v113 = vpack.c.b16 %v101, %v100
    %v114 = vpack.c.b16 %v103, %v102
    %v115 = vpack.c.b16 %v105, %v104
    %v116 = vpack.c.b16 %v107, %v106
    %v117 = vpack.c.b16 %v109, %v108
    %126 = vmatprep.subr.bf16.mxu0 0
    %127 = vmatpush1.bf16.msra.mxu0 %v110
    %128 = vmatprep.subr.bf16.mxu0 0
    %129 = vmatpush1.bf16.msra.mxu0 %v111
    %130 = vmatprep.subr.bf16.mxu0 0
    %131 = vmatpush1.bf16.msra.mxu0 %v112
    %132 = vmatprep.subr.bf16.mxu0 0
    %133 = vmatpush1.bf16.msra.mxu0 %v113
    %134 = vmatprep.subr.bf16.mxu0 0
    %135 = vmatpush1.bf16.msra.mxu0 %v114
    %136 = vmatprep.subr.bf16.mxu0 0
    %137 = vmatpush1.bf16.msra.mxu0 %v115
    %138 = vmatprep.subr.bf16.mxu0 0
    %139 = vmatpush1.bf16.msra.mxu0 %v116
    %140 = vmatprep.subr.bf16.mxu0 0
    %141 = vmatpush1.bf16.msra.mxu0 %v117
    %142 = vmatprep.subr.bf16.mxu0 0
    %143 = vmatpush1.bf16.msra.mxu0 0
    %144 = vmatprep.subr.bf16.mxu0 0
    %145 = vmatpush1.bf16.msra.mxu0 0
    %146 = vmatprep.subr.bf16.mxu0 0
    %147 = vmatpush1.bf16.msra.mxu0 0
    %148 = vmatprep.subr.bf16.mxu0 0
    %149 = vmatpush1.bf16.msra.mxu0 0
    %150 = vmatprep.subr.bf16.mxu0 0
    %151 = vmatpush1.bf16.msra.mxu0 0
    %152 = vmatprep.subr.bf16.mxu0 0
    %153 = vmatpush1.bf16.msra.mxu0 0
    %154 = vmatprep.subr.bf16.mxu0 0
    %155 = vmatpush1.bf16.msra.mxu0 0
    %156 = vmatprep.subr.bf16.mxu0 0
    %157 = vmatpush1.bf16.msra.mxu0 0
    %158 = vmatprep.mubr.bf16.mxu0 0
    %159 = vmatmul.mubr.bf16.gmra.mrb[0].mxu0 %v59
    %v160 = vpop.f32.mrb[0].mxu0
    %v161 = vadd.f32 0.0, %v160
    %v162 = vpop.f32.mrb[0].mxu0
    %v163 = vpop.f32.mrb[0].mxu0
    %v164 = vadd.f32 0.0, %v163
    %v165 = vpop.f32.mrb[0].mxu0
    %166 = vdwg.mxu0
    %v167 = vadd.f32 %v60, %v161
    %v168 = vadd.f32 %v61, %v164
    %vm169 = vcmask 261120
    %170 = vst.msk [vmem:[#allocation2] sm:$0xff] %vm169, %v167
    %171 = vst.msk [vmem:[#allocation2 + $0x8] sm:$0xff] %vm169, %v168
    // Predicated region
    $region14: #{tpu_custom_call.1} parent=1 // pred_check
      %p172 = pneg %p13
    $region15: #{tpu_custom_call.1} parent=1 // pred_check_branch
      %174 = sbr.rel (%p172) target = $region17
    $region16: #{tpu_custom_call.1} parent=1 // pred_region
      %v175 = vld [vmem:[#allocation2] sm:$0xff]
      %v176 = vld [vmem:[#allocation2 + $0x8] sm:$0xff]
      %177 = vst.msk [vmem:[#allocation3] sm:$0xff] %vm169, %v175
      %178 = vst.msk [vmem:[#allocation3 + $0x8] sm:$0xff] %vm169, %v176
    $region17: #{tpu_custom_call.1} parent=1 // pred_fallthru
      _
    // Predicated region
    $region18: #{tpu_custom_call.1} parent=1 // pred_check
      _
    $region19: #{tpu_custom_call.1} parent=1 // pred_check_branch
      %180 = sbr.rel (0) target = $region21
    $region20: #{tpu_custom_call.1} parent=1 // pred_region
      %s182 = ssub.s32 256, 256
      %183 = vsyncadd [#allocation4], %s182
      %s184 = sshll.u32 [#allocation3], 4
      %s185 = int_to_ptr.vmem [resolvable:$true] %s184
      %190 = dma.vmem_to_hbm [thread:$0]  %s185, 256, %s2, [#allocation4], 128, 128, 8
    $region21: #{tpu_custom_call.1} parent=1 // pred_fallthru
      _
    // Predicated region
    $region22: #{tpu_custom_call.1} parent=1 // pred_check
      _
    $region23: #{tpu_custom_call.1} parent=1 // pred_check_branch
      %192 = sbr.rel (0) target = $region25
    $region24: #{tpu_custom_call.1} parent=1 // pred_region
      %193 = dma.done [#allocation4], 256
    $region25: #{tpu_custom_call.1} parent=1 // pred_fallthru
      _
    %194 = vsyncpa [#allocation4], 1

</llo_original>
